<compile_context>
chip_gen: v5e
topology: v5e:2x2
jax: 0.10.0
libtpu: 0.0.40
codegen_flags: <defaults>
</compile_context>

<pallas_src>
import math

import jax
import jax.numpy as jnp
from jax.experimental import pallas as pl
from jax.experimental.pallas import tpu as pltpu

# ---- loss hyper-parameters (deterministic, in-script) -----------------------
ALPHA = 0.3        # Tversky false-positive weight
BETA = 0.7         # Tversky false-negative weight
SMOOTH = 1e-5
DO_BG = False      # drop background class (class 0) from the dice term
WEIGHT_CE = 1.0
WEIGHT_DICE = 1.0


def _fold_sublanes(x):
    """Sum sublane groups of x: (R, S, 128) -> (R, fold, 128).

    fold = 8 when S is a multiple of 8 (aligned full-vreg groups), otherwise
    S itself (no folding).  Aligned static slices + a tree of VPU adds keep
    the running partials lane-dense and avoid any cross-lane XLU work.
    """
    S = x.shape[1]
    rows = 8 if S % 8 == 0 else S
    k = S // rows
    chunks = [x[:, i * rows:(i + 1) * rows, :] for i in range(k)]
    while len(chunks) > 1:
        nxt = [a + b for a, b in zip(chunks[0::2], chunks[1::2])]
        if len(chunks) % 2:
            nxt.append(chunks[-1])
        chunks = nxt
    return chunks[0]


def _tversky_ce_kernel(logits_ref, tgt_ref, tp_ref, sp_ref, cnt_ref, ce_ref):
    # Zero the resident per-core accumulators at the first step of this core's
    # sub-grid (leading grid axis is the parallel per-core split).
    @pl.when((pl.program_id(1) == 0) & (pl.program_id(2) == 0))
    def _():
        tp_ref[...] = jnp.zeros_like(tp_ref)
        sp_ref[...] = jnp.zeros_like(sp_ref)
        cnt_ref[...] = jnp.zeros_like(cnt_ref)
        ce_ref[...] = jnp.zeros_like(ce_ref)

    logits = logits_ref[...].astype(jnp.float32)     # (C, S, 128)
    tgt = tgt_ref[...]                               # (1, S, 128) int32

    C = logits.shape[0]

    # softmax over the channel (major) axis — softmax_helper_dim1.
    # Channel reductions are plain elementwise max/add across vreg groups.
    m = jnp.max(logits, axis=0, keepdims=True)       # (1, S, 128)
    e = jnp.exp(logits - m)                          # (C, S, 128)  EUP
    s = jnp.sum(e, axis=0, keepdims=True)            # (1, S, 128)
    inv_s = 1.0 / s                                  # reciprocal on N elems only
    probs = e * inv_s                                # (C, S, 128)  cheap VPU mul

    # target selection mask along the channel axis
    class_ids = jax.lax.broadcasted_iota(jnp.int32, logits.shape, 0)
    mask = class_ids == tgt                          # (C, S, 128) bool

    zero = jnp.zeros_like(probs)
    tp_c = jnp.where(mask, probs, zero)              # probs at the target class
    lt_c = jnp.where(mask, logits, zero)             # logits at the target class
    onehot = mask.astype(jnp.float32)                # per-class pixel counts

    # cross entropy per pixel: -log softmax(x)[t] = logsumexp(x) - x[t]
    lse = m + jnp.log(s)                             # (1, S, 128)
    logit_t = jnp.sum(lt_c, axis=0, keepdims=True)   # (1, S, 128)
    ce_row = lse - logit_t                           # (1, S, 128)

    # lane/sublane-dense partial accumulation (fp/fn derived in the epilogue)
    tp_ref[...] += _fold_sublanes(tp_c)[None]        # sum(probs * onehot)
    sp_ref[...] += _fold_sublanes(probs)[None]       # sum(probs)
    cnt_ref[...] += _fold_sublanes(onehot)[None]     # sum(onehot)
    ce_ref[...] += _fold_sublanes(ce_row)[None]      # sum(-log p[target])


def _pick_tile_s(S_total, C, itemsize, cap_bytes=1 << 20):
    """Largest sublane tile TS (multiple of 8 dividing S_total, or the full
    extent) whose native-dtype logits block fits ~cap_bytes; prefer a TS that
    leaves an even tile count (2-core split on v7x)."""
    divs = [d for d in range(1, S_total + 1) if S_total % d == 0]

    def fits(d):
        return d * 128 * C * itemsize <= cap_bytes

    ok = [d for d in divs if (d % 8 == 0 or d == S_total) and fits(d)]
    if not ok:
        ok = [d for d in divs if fits(d)] or [1]
    even = [d for d in ok if (S_total // d) % 2 == 0]
    pool = even if even else ok
    return max(pool)


def tversky_and_ce_loss(net_output, target):
    """net_output: (B, C, *spatial) float; target: (B, 1, *spatial) int labels."""
    B, C = net_output.shape[0], net_output.shape[1]
    N = math.prod(net_output.shape[2:])
    assert N % 128 == 0, "flattened spatial extent must be a multiple of 128"
    S_total = N // 128

    # keep the native dtype in HBM; up-cast inside the kernel.
    # (B, C, S, 128): lane axis always full 128, sublane axis = spatial chunks.
    logits = net_output.reshape(B, C, S_total, 128)
    tgt = target.reshape(B, 1, S_total, 128).astype(jnp.int32)

    itemsize = jnp.dtype(logits.dtype).itemsize
    TS = _pick_tile_s(S_total, C, itemsize)
    nt = S_total // TS
    FOLD = 8 if TS % 8 == 0 else TS

    # Two per-core partial accumulators (v7x megacore); split whichever of the
    # tile axis / batch axis is even.
    if nt % 2 == 0:
        n_par, b_part, nt_part = 2, B, nt // 2

        def in_map(p, b, t):
            return (b, 0, p * nt_part + t, 0)
    elif B % 2 == 0:
        n_par, b_part, nt_part = 2, B // 2, nt

        def in_map(p, b, t):
            return (p * b_part + b, 0, t, 0)
    else:
        n_par, b_part, nt_part = 1, B, nt

        def in_map(p, b, t):
            return (b, 0, t, 0)

    def out_map(p, b, t):
        return (p, 0, 0, 0)

    tp_p, sp_p, cnt_p, ce_p = pl.pallas_call(
        _tversky_ce_kernel,
        out_shape=(
            jax.ShapeDtypeStruct((n_par, C, FOLD, 128), jnp.float32),
            jax.ShapeDtypeStruct((n_par, C, FOLD, 128), jnp.float32),
            jax.ShapeDtypeStruct((n_par, C, FOLD, 128), jnp.float32),
            jax.ShapeDtypeStruct((n_par, 1, FOLD, 128), jnp.float32),
        ),
        grid_spec=pltpu.PrefetchScalarGridSpec(
            num_scalar_prefetch=0,
            grid=(n_par, b_part, nt_part),
            in_specs=[
                pl.BlockSpec((pl.Squeezed(), C, TS, 128), in_map),
                pl.BlockSpec((pl.Squeezed(), 1, TS, 128), in_map),
            ],
            out_specs=[
                pl.BlockSpec((1, C, FOLD, 128), out_map),
                pl.BlockSpec((1, C, FOLD, 128), out_map),
                pl.BlockSpec((1, C, FOLD, 128), out_map),
                pl.BlockSpec((1, 1, FOLD, 128), out_map),
            ],
        ),
        compiler_params=pltpu.CompilerParams(
            dimension_semantics=("parallel", "arbitrary", "arbitrary"),
            vmem_limit_bytes=32 * 1024 * 1024,
        ),
    )(logits, tgt)

    # collapse per-core / per-lane partials (tiny, plain JAX)
    tp = jnp.sum(tp_p, axis=(0, 2, 3))        # (C,) sum(probs * onehot)
    sum_p = jnp.sum(sp_p, axis=(0, 2, 3))     # (C,) sum(probs)
    cnt = jnp.sum(cnt_p, axis=(0, 2, 3))      # (C,) sum(onehot)
    ce_sum = jnp.sum(ce_p)

    fp = sum_p - tp
    fn = cnt - tp
    if not DO_BG:
        tp, fp, fn = tp[1:], fp[1:], fn[1:]

    # Tversky index (batch_dice=True: tp/fp/fn already summed over batch+space)
    tversky = (tp + SMOOTH) / (tp + ALPHA * fp + BETA * fn + SMOOTH)
    dc_loss = -jnp.mean(tversky)

    ce_loss = ce_sum / (B * N)             # CrossEntropyLoss reduction='mean'

    return WEIGHT_CE * ce_loss + WEIGHT_DICE * dc_loss


def _reference(net_output, target):
    """Pure-JAX reference mirroring the PyTorch forward semantics."""
    B, C = net_output.shape[0], net_output.shape[1]
    probs = jax.nn.softmax(net_output.astype(jnp.float32), axis=1)
    onehot = jax.nn.one_hot(target[:, 0], C, axis=1, dtype=jnp.float32)
    axes = (0,) + tuple(range(2, net_output.ndim))   # batch_dice=True
    tp = jnp.sum(probs * onehot, axis=axes)
    fp = jnp.sum(probs * (1.0 - onehot), axis=axes)
    fn = jnp.sum((1.0 - probs) * onehot, axis=axes)
    if not DO_BG:
        tp, fp, fn = tp[1:], fp[1:], fn[1:]
    tversky = (tp + SMOOTH) / (tp + ALPHA * fp + BETA * fn + SMOOTH)
    dc_loss = -jnp.mean(tversky)
    logp = jax.nn.log_softmax(net_output.astype(jnp.float32), axis=1)
    ce_loss = -jnp.mean(jnp.take_along_axis(logp, target, axis=1))
    return WEIGHT_CE * ce_loss + WEIGHT_DICE * dc_loss


if __name__ == "__main__":
    key = jax.random.PRNGKey(0)
    k1, k2 = jax.random.split(key)

    B, C, H, W = 2, 4, 16, 16
    net_output = jax.random.normal(k1, (B, C, H, W), dtype=jnp.float32)
    target = jax.random.randint(k2, (B, 1, H, W), 0, C, dtype=jnp.int32)

    loss = tversky_and_ce_loss(net_output, target)
    loss = jax.block_until_ready(loss)

    ref = _reference(net_output, target)
    assert jnp.allclose(loss, ref, atol=1e-5, rtol=1e-5), (loss, ref)

    print("KERNEL_OK")
</pallas_src>

<mosaic_0001>
module attributes {stable_mosaic.version = 11 : i64} {
  func.func @_tversky_ce_kernel(%arg0: i32, %arg1: i32, %arg2: i32, %arg3: memref<1x4x2x128xf32, #tpu.memory_space<vmem>>, %arg4: memref<1x1x2x128xi32, #tpu.memory_space<vmem>>, %arg5: memref<1x4x2x128xf32, #tpu.memory_space<vmem>>, %arg6: memref<1x4x2x128xf32, #tpu.memory_space<vmem>>, %arg7: memref<1x4x2x128xf32, #tpu.memory_space<vmem>>, %arg8: memref<1x1x2x128xf32, #tpu.memory_space<vmem>>) attributes {dimension_semantics = [#tpu.dimension_semantics<parallel>, #tpu.dimension_semantics<arbitrary>, #tpu.dimension_semantics<arbitrary>], iteration_bounds = array<i64: 2, 1, 1>, scalar_prefetch = 0 : i64, scratch_operands = 0 : i64, tpu.core_type = #tpu.core_type<tc>, window_params = [{transform_indices = @transform_0, window_bounds = array<i64: 1, 4, 2, 128>}, {transform_indices = @transform_1, window_bounds = array<i64: 1, 1, 2, 128>}, {transform_indices = @transform_2, window_bounds = array<i64: 1, 4, 2, 128>}, {transform_indices = @transform_3, window_bounds = array<i64: 1, 4, 2, 128>}, {transform_indices = @transform_4, window_bounds = array<i64: 1, 4, 2, 128>}, {transform_indices = @transform_5, window_bounds = array<i64: 1, 1, 2, 128>}]} {
    %c0_i32 = arith.constant 0 : i32
    %0 = arith.cmpi eq, %arg1, %c0_i32 : i32
    %c0_i32_0 = arith.constant 0 : i32
    %1 = arith.cmpi eq, %arg2, %c0_i32_0 : i32
    %2 = arith.andi %0, %1 : i1
    %3 = arith.extui %2 : i1 to i32
    %c0_i32_1 = arith.constant 0 : i32
    %4 = arith.cmpi ne, %3, %c0_i32_1 : i32
    scf.if %4 {
      %cst_45 = arith.constant 0.000000e+00 : f32
      %49 = vector.broadcast %cst_45 : f32 to vector<1x4x2x128xf32>
      %c0_46 = arith.constant 0 : index
      %c0_47 = arith.constant 0 : index
      %c0_48 = arith.constant 0 : index
      %c0_49 = arith.constant 0 : index
      %50 = vector.load %arg5[%c0_46, %c0_47, %c0_48, %c0_49] : memref<1x4x2x128xf32, #tpu.memory_space<vmem>>, vector<1x4x2x128xf32>
      tpu.vector_store %arg5[%c0_46, %c0_47, %c0_48, %c0_49], %49 {strides = array<i32>} : memref<1x4x2x128xf32, #tpu.memory_space<vmem>>, vector<1x4x2x128xf32>,
      %cst_50 = arith.constant 0.000000e+00 : f32
      %51 = vector.broadcast %cst_50 : f32 to vector<1x4x2x128xf32>
      %c0_51 = arith.constant 0 : index
      %c0_52 = arith.constant 0 : index
      %c0_53 = arith.constant 0 : index
      %c0_54 = arith.constant 0 : index
      %52 = vector.load %arg6[%c0_51, %c0_52, %c0_53, %c0_54] : memref<1x4x2x128xf32, #tpu.memory_space<vmem>>, vector<1x4x2x128xf32>
      tpu.vector_store %arg6[%c0_51, %c0_52, %c0_53, %c0_54], %51 {strides = array<i32>} : memref<1x4x2x128xf32, #tpu.memory_space<vmem>>, vector<1x4x2x128xf32>,
      %cst_55 = arith.constant 0.000000e+00 : f32
      %53 = vector.broadcast %cst_55 : f32 to vector<1x4x2x128xf32>
      %c0_56 = arith.constant 0 : index
      %c0_57 = arith.constant 0 : index
      %c0_58 = arith.constant 0 : index
      %c0_59 = arith.constant 0 : index
      %54 = vector.load %arg7[%c0_56, %c0_57, %c0_58, %c0_59] : memref<1x4x2x128xf32, #tpu.memory_space<vmem>>, vector<1x4x2x128xf32>
      tpu.vector_store %arg7[%c0_56, %c0_57, %c0_58, %c0_59], %53 {strides = array<i32>} : memref<1x4x2x128xf32, #tpu.memory_space<vmem>>, vector<1x4x2x128xf32>,
      %cst_60 = arith.constant 0.000000e+00 : f32
      %55 = vector.broadcast %cst_60 : f32 to vector<1x1x2x128xf32>
      %c0_61 = arith.constant 0 : index
      %c0_62 = arith.constant 0 : index
      %c0_63 = arith.constant 0 : index
      %c0_64 = arith.constant 0 : index
      %56 = vector.load %arg8[%c0_61, %c0_62, %c0_63, %c0_64] : memref<1x1x2x128xf32, #tpu.memory_space<vmem>>, vector<1x1x2x128xf32>
      tpu.vector_store %arg8[%c0_61, %c0_62, %c0_63, %c0_64], %55 {strides = array<i32>} : memref<1x1x2x128xf32, #tpu.memory_space<vmem>>, vector<1x1x2x128xf32>,
    } else {
    }
    %c0 = arith.constant 0 : index
    %c0_2 = arith.constant 0 : index
    %c0_3 = arith.constant 0 : index
    %c0_4 = arith.constant 0 : index
    %5 = vector.load %arg3[%c0, %c0_2, %c0_3, %c0_4] : memref<1x4x2x128xf32, #tpu.memory_space<vmem>>, vector<1x4x2x128xf32>
    %6 = vector.shape_cast %5 : vector<1x4x2x128xf32> to vector<4x2x128xf32>
    %c0_5 = arith.constant 0 : index
    %c0_6 = arith.constant 0 : index
    %c0_7 = arith.constant 0 : index
    %c0_8 = arith.constant 0 : index
    %7 = vector.load %arg4[%c0_5, %c0_6, %c0_7, %c0_8] : memref<1x1x2x128xi32, #tpu.memory_space<vmem>>, vector<1x1x2x128xi32>
    %8 = vector.shape_cast %7 : vector<1x1x2x128xi32> to vector<1x2x128xi32>
    %cst = arith.constant dense<0xFF800000> : vector<2x128xf32>
    %9 = vector.multi_reduction <maximumf>, %6, %cst [0] : vector<4x2x128xf32> to vector<2x128xf32>
    %10 = vector.shape_cast %9 : vector<2x128xf32> to vector<1x2x128xf32>
    %11 = vector.broadcast %10 : vector<1x2x128xf32> to vector<4x2x128xf32>
    %12 = arith.subf %6, %11 : vector<4x2x128xf32>
    %13 = math.exp %12 : vector<4x2x128xf32>
    %cst_9 = arith.constant dense<0.000000e+00> : vector<2x128xf32>
    %14 = vector.multi_reduction <add>, %13, %cst_9 [0] : vector<4x2x128xf32> to vector<2x128xf32>
    %15 = vector.shape_cast %14 : vector<2x128xf32> to vector<1x2x128xf32>
    %cst_10 = arith.constant 1.000000e+00 : f32
    %16 = vector.broadcast %cst_10 : f32 to vector<1x2x128xf32>
    %17 = arith.divf %16, %15 : vector<1x2x128xf32>
    %18 = vector.broadcast %17 : vector<1x2x128xf32> to vector<4x2x128xf32>
    %19 = arith.mulf %13, %18 : vector<4x2x128xf32>
    %20 = tpu.iota {dimensions = array<i32: 0>} : vector<4x2x128xi32>
    %21 = vector.broadcast %8 : vector<1x2x128xi32> to vector<4x2x128xi32>
    %22 = arith.cmpi eq, %20, %21 : vector<4x2x128xi32>
    %cst_11 = arith.constant 0.000000e+00 : f32
    %23 = vector.broadcast %cst_11 : f32 to vector<4x2x128xf32>
    %24 = arith.select %22, %19, %23 : vector<4x2x128xi1>, vector<4x2x128xf32>
    %25 = arith.select %22, %6, %23 : vector<4x2x128xi1>, vector<4x2x128xf32>
    %26 = arith.extui %22 : vector<4x2x128xi1> to vector<4x2x128xi32>
    %27 = arith.sitofp %26 : vector<4x2x128xi32> to vector<4x2x128xf32>
    %28 = math.log %15 : vector<1x2x128xf32>
    %29 = arith.addf %10, %28 : vector<1x2x128xf32>
    %cst_12 = arith.constant dense<0.000000e+00> : vector<2x128xf32>
    %30 = vector.multi_reduction <add>, %25, %cst_12 [0] : vector<4x2x128xf32> to vector<2x128xf32>
    %31 = vector.shape_cast %30 : vector<2x128xf32> to vector<1x2x128xf32>
    %32 = arith.subf %29, %31 : vector<1x2x128xf32>
    %c0_13 = arith.constant 0 : index
    %c0_14 = arith.constant 0 : index
    %c0_15 = arith.constant 0 : index
    %c0_16 = arith.constant 0 : index
    %33 = vector.load %arg5[%c0_13, %c0_14, %c0_15, %c0_16] : memref<1x4x2x128xf32, #tpu.memory_space<vmem>>, vector<1x4x2x128xf32>
    %34 = vector.shape_cast %24 : vector<4x2x128xf32> to vector<1x4x2x128xf32>
    %35 = arith.addf %33, %34 : vector<1x4x2x128xf32>
    %c0_17 = arith.constant 0 : index
    %c0_18 = arith.constant 0 : index
    %c0_19 = arith.constant 0 : index
    %c0_20 = arith.constant 0 : index
    %36 = vector.load %arg5[%c0_17, %c0_18, %c0_19, %c0_20] : memref<1x4x2x128xf32, #tpu.memory_space<vmem>>, vector<1x4x2x128xf32>
    tpu.vector_store %arg5[%c0_17, %c0_18, %c0_19, %c0_20], %35 {strides = array<i32>} : memref<1x4x2x128xf32, #tpu.memory_space<vmem>>, vector<1x4x2x128xf32>,
    %c0_21 = arith.constant 0 : index
    %c0_22 = arith.constant 0 : index
    %c0_23 = arith.constant 0 : index
    %c0_24 = arith.constant 0 : index
    %37 = vector.load %arg6[%c0_21, %c0_22, %c0_23, %c0_24] : memref<1x4x2x128xf32, #tpu.memory_space<vmem>>, vector<1x4x2x128xf32>
    %38 = vector.shape_cast %19 : vector<4x2x128xf32> to vector<1x4x2x128xf32>
    %39 = arith.addf %37, %38 : vector<1x4x2x128xf32>
    %c0_25 = arith.constant 0 : index
    %c0_26 = arith.constant 0 : index
    %c0_27 = arith.constant 0 : index
    %c0_28 = arith.constant 0 : index
    %40 = vector.load %arg6[%c0_25, %c0_26, %c0_27, %c0_28] : memref<1x4x2x128xf32, #tpu.memory_space<vmem>>, vector<1x4x2x128xf32>
    tpu.vector_store %arg6[%c0_25, %c0_26, %c0_27, %c0_28], %39 {strides = array<i32>} : memref<1x4x2x128xf32, #tpu.memory_space<vmem>>, vector<1x4x2x128xf32>,
    %c0_29 = arith.constant 0 : index
    %c0_30 = arith.constant 0 : index
    %c0_31 = arith.constant 0 : index
    %c0_32 = arith.constant 0 : index
    %41 = vector.load %arg7[%c0_29, %c0_30, %c0_31, %c0_32] : memref<1x4x2x128xf32, #tpu.memory_space<vmem>>, vector<1x4x2x128xf32>
    %42 = vector.shape_cast %27 : vector<4x2x128xf32> to vector<1x4x2x128xf32>
    %43 = arith.addf %41, %42 : vector<1x4x2x128xf32>
    %c0_33 = arith.constant 0 : index
    %c0_34 = arith.constant 0 : index
    %c0_35 = arith.constant 0 : index
    %c0_36 = arith.constant 0 : index
    %44 = vector.load %arg7[%c0_33, %c0_34, %c0_35, %c0_36] : memref<1x4x2x128xf32, #tpu.memory_space<vmem>>, vector<1x4x2x128xf32>
    tpu.vector_store %arg7[%c0_33, %c0_34, %c0_35, %c0_36], %43 {strides = array<i32>} : memref<1x4x2x128xf32, #tpu.memory_space<vmem>>, vector<1x4x2x128xf32>,
    %c0_37 = arith.constant 0 : index
    %c0_38 = arith.constant 0 : index
    %c0_39 = arith.constant 0 : index
    %c0_40 = arith.constant 0 : index
    %45 = vector.load %arg8[%c0_37, %c0_38, %c0_39, %c0_40] : memref<1x1x2x128xf32, #tpu.memory_space<vmem>>, vector<1x1x2x128xf32>
    %46 = vector.shape_cast %32 : vector<1x2x128xf32> to vector<1x1x2x128xf32>
    %47 = arith.addf %45, %46 : vector<1x1x2x128xf32>
    %c0_41 = arith.constant 0 : index
    %c0_42 = arith.constant 0 : index
    %c0_43 = arith.constant 0 : index
    %c0_44 = arith.constant 0 : index
    %48 = vector.load %arg8[%c0_41, %c0_42, %c0_43, %c0_44] : memref<1x1x2x128xf32, #tpu.memory_space<vmem>>, vector<1x1x2x128xf32>
    tpu.vector_store %arg8[%c0_41, %c0_42, %c0_43, %c0_44], %47 {strides = array<i32>} : memref<1x1x2x128xf32, #tpu.memory_space<vmem>>, vector<1x1x2x128xf32>,
    return
  }
  func.func @transform_0(%arg0: i32, %arg1: i32, %arg2: i32) -> (i32, i32, i32, i32) {
    %c1_i32 = arith.constant 1 : i32
    %0 = arith.muli %arg0, %c1_i32 : i32
    %1 = arith.addi %0, %arg1 : i32
    %c0_i32 = arith.constant 0 : i32
    %c0_i32_0 = arith.constant 0 : i32
    %c0_i32_1 = arith.constant 0 : i32
    return %1, %c0_i32, %arg2, %c0_i32_0 : i32, i32, i32, i32
  }
  func.func @transform_1(%arg0: i32, %arg1: i32, %arg2: i32) -> (i32, i32, i32, i32) {
    %c1_i32 = arith.constant 1 : i32
    %0 = arith.muli %arg0, %c1_i32 : i32
    %1 = arith.addi %0, %arg1 : i32
    %c0_i32 = arith.constant 0 : i32
    %c0_i32_0 = arith.constant 0 : i32
    %c0_i32_1 = arith.constant 0 : i32
    return %1, %c0_i32, %arg2, %c0_i32_0 : i32, i32, i32, i32
  }
  func.func @transform_2(%arg0: i32, %arg1: i32, %arg2: i32) -> (i32, i32, i32, i32) {
    %c0_i32 = arith.constant 0 : i32
    %c0_i32_0 = arith.constant 0 : i32
    %c0_i32_1 = arith.constant 0 : i32
    %c0_i32_2 = arith.constant 0 : i32
    return %arg0, %c0_i32, %c0_i32_0, %c0_i32_1 : i32, i32, i32, i32
  }
  func.func @transform_3(%arg0: i32, %arg1: i32, %arg2: i32) -> (i32, i32, i32, i32) {
    %c0_i32 = arith.constant 0 : i32
    %c0_i32_0 = arith.constant 0 : i32
    %c0_i32_1 = arith.constant 0 : i32
    %c0_i32_2 = arith.constant 0 : i32
    return %arg0, %c0_i32, %c0_i32_0, %c0_i32_1 : i32, i32, i32, i32
  }
  func.func @transform_4(%arg0: i32, %arg1: i32, %arg2: i32) -> (i32, i32, i32, i32) {
    %c0_i32 = arith.constant 0 : i32
    %c0_i32_0 = arith.constant 0 : i32
    %c0_i32_1 = arith.constant 0 : i32
    %c0_i32_2 = arith.constant 0 : i32
    return %arg0, %c0_i32, %c0_i32_0, %c0_i32_1 : i32, i32, i32, i32
  }
  func.func @transform_5(%arg0: i32, %arg1: i32, %arg2: i32) -> (i32, i32, i32, i32) {
    %c0_i32 = arith.constant 0 : i32
    %c0_i32_0 = arith.constant 0 : i32
    %c0_i32_1 = arith.constant 0 : i32
    %c0_i32_2 = arith.constant 0 : i32
    return %arg0, %c0_i32, %c0_i32_0, %c0_i32_1 : i32, i32, i32, i32
  }
}

</mosaic_0001>

<llo_original>
// kernel: tpu_custom_call.1
$region0: #{tpu_custom_call.1}
  #allocation0 [shape = 'u32[]', space=smem, size = 0x4, offset = 0x4, fixed_abs, tag = 'smem constant byte address 0x4 - core index']
  #allocation1 [shape = 'u32[72,128]{1,0:T(1,128)}', space=vmem, size = 0x9000, scoped, tag = 'internal scratch']
  %s0 = inlined_call_operand.hbm [shape: f32[2,4,2,128], index: 0, kind: input, shape index: {}]
  %s1 = inlined_call_operand.hbm [shape: s32[2,1,2,128], index: 1, kind: input, shape index: {}]
  %s2 = inlined_call_operand.hbm [shape: f32[2,4,2,128], index: 2, kind: output, shape index: {0}]
  %s3 = inlined_call_operand.hbm [shape: f32[2,4,2,128], index: 3, kind: output, shape index: {1}]
  %s4 = inlined_call_operand.hbm [shape: f32[2,4,2,128], index: 4, kind: output, shape index: {2}]
  %s5 = inlined_call_operand.hbm [shape: f32[2,1,2,128], index: 5, kind: output, shape index: {3}]
  %6 = xla_tuple %s2, %s3, %s4, %s5
  %s7 = sld [smem:[#allocation0]]
  $region77: #{tpu_custom_call.1} parent=0
    _
  %s9 = ssub.s32 1, %s7
  %s10 = scalar_select 0, %s9, %s7
  $region1: #{tpu_custom_call.1} parent=0
    #allocation2 [shape = 'u8[8192]{0}', space=vmem, size = 0x2000, scoped, tag = 'input window, operand 0']
    #allocation3 [shape = 's32[2]{0}', space=sflag, size = 0x8, scoped, tag = 'scoped memory for tpu_custom_call.1']
    #allocation4 [shape = 's32[2]{0}', space=sflag, size = 0x8, scoped, tag = 'scoped memory for tpu_custom_call.1']
    #allocation5 [shape = 'u8[2048]{0}', space=vmem, size = 0x800, scoped, tag = 'input window, operand 1']
    #allocation6 [shape = 's32[2]{0}', space=sflag, size = 0x8, scoped, tag = 'scoped memory for tpu_custom_call.1']
    #allocation7 [shape = 'u8[8192]{0}', space=vmem, size = 0x2000, scoped, tag = 'output window, operand 0']
    #allocation8 [shape = 'u8[8192]{0}', space=vmem, size = 0x2000, scoped, tag = 'output window, operand 1']
    #allocation9 [shape = 's32[2]{0}', space=sflag, size = 0x8, scoped, tag = 'scoped memory for tpu_custom_call.1']
    #allocation10 [shape = 'u8[8192]{0}', space=vmem, size = 0x2000, scoped, tag = 'output window, operand 2']
    #allocation11 [shape = 'u8[2048]{0}', space=vmem, size = 0x800, scoped, tag = 'output window, operand 3']
    #allocation12 [shape = 's32[2]{0}', space=sflag, size = 0x8, scoped, tag = 'scoped memory for tpu_custom_call.1']
    %11 = vsyncpa [#allocation3], 0
    %s12 = scalar_lea.sflag [#allocation3], 1
    %13 = vsyncpa %s12, 0
    %14 = vsyncpa [#allocation6], 0
    %s15 = scalar_lea.sflag [#allocation6], 1
    %16 = vsyncpa %s15, 0
    %17 = vsyncpa [#allocation4], 0
    %s18 = scalar_lea.sflag [#allocation4], 1
    %19 = vsyncpa %s18, 0
    %20 = vsyncpa [#allocation9], 0
    %s21 = scalar_lea.sflag [#allocation9], 1
    %22 = vsyncpa %s21, 0
    %23 = vsyncpa [#allocation12], 0
    %s24 = scalar_lea.sflag [#allocation12], 1
    %25 = vsyncpa %s24, 0
    loop: start=0, step=1, limit=4
    $region2: #{tpu_custom_call.1} parent=1 // loop_pre_header
      _
    $region3: #{tpu_custom_call.1} parent=1 // loop_header
      %s27 = sphi 0, %s31
      %p28 = scmp.ge.s32.totalorder %s27, 4
      %s34 = sphi 0, %s53
      %s35 = sphi 0, %s49
      %s36 = sphi 0, %s45
      %s37 = sphi 0, %s34
      %s38 = sphi 0, %s35
      %s39 = sphi 0, %s36
      %s40 = sphi 0, %s37
      %s41 = sphi 0, %s38
      %s42 = sphi 0, %s39
      %s60 = sphi 0, %s62
      %s63 = sphi 0, %s60
      %s64 = sphi 0, %s63
      %s80 = sphi 0, %s64
      %s90 = sphi 0, %s92
      %s93 = sphi 0, %s90
      %s94 = sphi 0, %s93
      %s110 = sphi 0, %s94
      %s116 = sphi 0, %s118
      %s119 = sphi 0, %s116
      %s120 = sphi 0, %s119
      %s136 = sphi 0, %s120
      %s142 = sphi 0, %s144
      %s145 = sphi 0, %s142
      %s146 = sphi 0, %s145
      %s162 = sphi 0, %s146
      %s168 = sphi 0, %s170
      %s171 = sphi 0, %s168
      %s172 = sphi 0, %s171
      %s188 = sphi 0, %s172
      %s194 = sphi 0, %s196
      %s197 = sphi 0, %s194
      %s198 = sphi 0, %s197
      %s214 = sphi 0, %s198
    $region4: #{tpu_custom_call.1} parent=1 // loop_header_branch
      %30 = sbr.rel (%p28) target = $region8
    $region5: #{tpu_custom_call.1} parent=1 // loop_body
      %s32 = ssub.s32 %s27, 1
      %s33 = ssub.s32 %s27, 2
      %s43 = sadd.s32 1, %s36
      %p44 = scmp.ge.s32.totalorder %s43, 1
      %s45 = scalar_select %p44, 0, %s43
      %s46 = sadd.s32 1, %s35
      %s47 = scalar_select %p44, %s46, %s35
      %p48 = scmp.ge.s32.totalorder %s47, 1
      %s49 = scalar_select %p48, 0, %s47
      %s50 = sadd.s32 1, %s34
      %s51 = scalar_select %p48, %s50, %s34
      %p52 = scmp.ge.s32.totalorder %s51, 2
      %s53 = scalar_select %p52, 0, %s51
      %s54 = sadd.s32 %s34, %s35
      %s55 = sadd.s32 %s53, %s49
      %s56 = ssub.s32 %s54, %s55
      %s57 = ssub.s32 %s36, %s45
      %s58 = sor.u32 %s56, %s57
      %p59 = scmp.eq.s32.totalorder %s58, 0
      %s61 = sadd.s32 %s60, 1
      %s62 = scalar_select %p59, %s60, %s61
      %p65 = pneg %p59
      %p66 = scmp.eq.s32.totalorder %s27, 1
      %p67 = por %p65, %p66
      %p68 = scmp.ne.s32.totalorder %s60, %s63
      %p69 = scmp.eq.s32.totalorder %s27, 0
      %p70 = por %p68, %p69
      %p71 = scmp.ne.s32.totalorder %s60, %s63
      %p72 = scmp.eq.s32.totalorder %s32, 1
      %p73 = por %p71, %p72
      %p74 = scmp.ne.s32.totalorder %s63, %s64
      %p75 = scmp.eq.s32.totalorder %s32, 0
      %p76 = por %p74, %p75
      %p77 = scmp.ne.s32.totalorder %s63, %s64
      %p78 = scmp.eq.s32.totalorder %s33, 1
      %p79 = por %p77, %p78
      %p81 = scmp.ne.s32.totalorder %s64, %s80
      %p82 = scmp.eq.s32.totalorder %s33, 0
      %p83 = por %p81, %p82
      %s84 = sadd.s32 %s34, %s35
      %s85 = sadd.s32 %s53, %s49
      %s86 = ssub.s32 %s84, %s85
      %s87 = ssub.s32 %s36, %s45
      %s88 = sor.u32 %s86, %s87
      %p89 = scmp.eq.s32.totalorder %s88, 0
      %s91 = sadd.s32 %s90, 1
      %s92 = scalar_select %p89, %s90, %s91
      %p95 = pneg %p89
      %p96 = scmp.eq.s32.totalorder %s27, 1
      %p97 = por %p95, %p96
      %p98 = scmp.ne.s32.totalorder %s90, %s93
      %p99 = scmp.eq.s32.totalorder %s27, 0
      %p100 = por %p98, %p99
      %p101 = scmp.ne.s32.totalorder %s90, %s93
      %p102 = scmp.eq.s32.totalorder %s32, 1
      %p103 = por %p101, %p102
      %p104 = scmp.ne.s32.totalorder %s93, %s94
      %p105 = scmp.eq.s32.totalorder %s32, 0
      %p106 = por %p104, %p105
      %p107 = scmp.ne.s32.totalorder %s93, %s94
      %p108 = scmp.eq.s32.totalorder %s33, 1
      %p109 = por %p107, %p108
      %p111 = scmp.ne.s32.totalorder %s94, %s110
      %p112 = scmp.eq.s32.totalorder %s33, 0
      %p113 = por %p111, %p112
      %s114 = ssub.s32 %s34, %s53
      %p115 = scmp.eq.s32.totalorder %s114, 0
      %s117 = sadd.s32 %s116, 1
      %s118 = scalar_select %p115, %s116, %s117
      %p121 = pneg %p115
      %p122 = scmp.eq.s32.totalorder %s27, 1
      %p123 = por %p121, %p122
      %p124 = scmp.ne.s32.totalorder %s116, %s119
      %p125 = scmp.eq.s32.totalorder %s27, 0
      %p126 = por %p124, %p125
      %p127 = scmp.ne.s32.totalorder %s116, %s119
      %p128 = scmp.eq.s32.totalorder %s32, 1
      %p129 = por %p127, %p128
      %p130 = scmp.ne.s32.totalorder %s119, %s120
      %p131 = scmp.eq.s32.totalorder %s32, 0
      %p132 = por %p130, %p131
      %p133 = scmp.ne.s32.totalorder %s119, %s120
      %p134 = scmp.eq.s32.totalorder %s33, 1
      %p135 = por %p133, %p134
      %p137 = scmp.ne.s32.totalorder %s120, %s136
      %p138 = scmp.eq.s32.totalorder %s33, 0
      %p139 = por %p137, %p138
      %s140 = ssub.s32 %s34, %s53
      %p141 = scmp.eq.s32.totalorder %s140, 0
      %s143 = sadd.s32 %s142, 1
      %s144 = scalar_select %p141, %s142, %s143
      %p147 = pneg %p141
      %p148 = scmp.eq.s32.totalorder %s27, 1
      %p149 = por %p147, %p148
      %p150 = scmp.ne.s32.totalorder %s142, %s145
      %p151 = scmp.eq.s32.totalorder %s27, 0
      %p152 = por %p150, %p151
      %p153 = scmp.ne.s32.totalorder %s142, %s145
      %p154 = scmp.eq.s32.totalorder %s32, 1
      %p155 = por %p153, %p154
      %p156 = scmp.ne.s32.totalorder %s145, %s146
      %p157 = scmp.eq.s32.totalorder %s32, 0
      %p158 = por %p156, %p157
      %p159 = scmp.ne.s32.totalorder %s145, %s146
      %p160 = scmp.eq.s32.totalorder %s33, 1
      %p161 = por %p159, %p160
      %p163 = scmp.ne.s32.totalorder %s146, %s162
      %p164 = scmp.eq.s32.totalorder %s33, 0
      %p165 = por %p163, %p164
      %s166 = ssub.s32 %s34, %s53
      %p167 = scmp.eq.s32.totalorder %s166, 0
      %s169 = sadd.s32 %s168, 1
      %s170 = scalar_select %p167, %s168, %s169
      %p173 = pneg %p167
      %p174 = scmp.eq.s32.totalorder %s27, 1
      %p175 = por %p173, %p174
      %p176 = scmp.ne.s32.totalorder %s168, %s171
      %p177 = scmp.eq.s32.totalorder %s27, 0
      %p178 = por %p176, %p177
      %p179 = scmp.ne.s32.totalorder %s168, %s171
      %p180 = scmp.eq.s32.totalorder %s32, 1
      %p181 = por %p179, %p180
      %p182 = scmp.ne.s32.totalorder %s171, %s172
      %p183 = scmp.eq.s32.totalorder %s32, 0
      %p184 = por %p182, %p183
      %p185 = scmp.ne.s32.totalorder %s171, %s172
      %p186 = scmp.eq.s32.totalorder %s33, 1
      %p187 = por %p185, %p186
      %p189 = scmp.ne.s32.totalorder %s172, %s188
      %p190 = scmp.eq.s32.totalorder %s33, 0
      %p191 = por %p189, %p190
      %s192 = ssub.s32 %s34, %s53
      %p193 = scmp.eq.s32.totalorder %s192, 0
      %s195 = sadd.s32 %s194, 1
      %s196 = scalar_select %p193, %s194, %s195
      %p199 = pneg %p193
      %p200 = scmp.eq.s32.totalorder %s27, 1
      %p201 = por %p199, %p200
      %p202 = scmp.ne.s32.totalorder %s194, %s197
      %p203 = scmp.eq.s32.totalorder %s27, 0
      %p204 = por %p202, %p203
      %p205 = scmp.ne.s32.totalorder %s194, %s197
      %p206 = scmp.eq.s32.totalorder %s32, 1
      %p207 = por %p205, %p206
      %p208 = scmp.ne.s32.totalorder %s197, %s198
      %p209 = scmp.eq.s32.totalorder %s32, 0
      %p210 = por %p208, %p209
      %p211 = scmp.ne.s32.totalorder %s197, %s198
      %p212 = scmp.eq.s32.totalorder %s33, 1
      %p213 = por %p211, %p212
      %p215 = scmp.ne.s32.totalorder %s198, %s214
      %p216 = scmp.eq.s32.totalorder %s33, 0
      %p217 = por %p215, %p216
      %p218 = scmp.le.s32.totalorder 1, %s27
      %p219 = scmp.lt.s32.totalorder %s27, 3
      %p220 = pnand %p218, %p219
      %p221 = pneg %p220
      // Predicated region
      $region9: #{tpu_custom_call.1} parent=5 // pred_check
        _
      $region10: #{tpu_custom_call.1} parent=5 // pred_check_branch
        %223 = sbr.rel (%p220) target = $region12
      $region11: #{tpu_custom_call.1} parent=5 // pred_region
        %s224 = ssub.s32 %s27, 1
      $region12: #{tpu_custom_call.1} parent=5 // pred_fallthru
        _
      %p225 = scmp.lt.s32.totalorder %s27, 2
      // Predicated region
      $region13: #{tpu_custom_call.1} parent=5 // pred_check
        %p226 = pneg %p225
      $region14: #{tpu_custom_call.1} parent=5 // pred_check_branch
        %228 = sbr.rel (%p226) target = $region16
      $region15: #{tpu_custom_call.1} parent=5 // pred_region
        // Predicated region
        $region17: #{tpu_custom_call.1} parent=15 // pred_check
          %p229 = pneg %p70
        $region18: #{tpu_custom_call.1} parent=15 // pred_check_branch
          %231 = sbr.rel (%p229) target = $region20
        $region19: #{tpu_custom_call.1} parent=15 // pred_region
          %s232 = sand.u32 %s60, 1
          %s233 = scalar_lea.sflag [#allocation3], %s232
          %s234 = sand.u32 %s60, 1
          %s235 = smul.addr %s234, 8
          %s236 = scalar_lea.vmem [#allocation2], %s235
          %s237 = sadd.s32 %s34, %s35
          %239 = vsyncadd %s233, 0
          %s240 = smul.addr %s237, 4
          %s241 = sadd.s32 %s36, %s240
          %s242 = smul.addr %s241, 2
          %s243 = scalar_lea.hbm %s0, %s242
          %s244 = sshll.u32 %s243, 4
          %s245 = int_to_ptr.hbm [resolvable:$true] %s244
          %s246 = sshll.u32 %s236, 4
          %s247 = int_to_ptr.vmem [resolvable:$true] %s246
          %252 = dma.hbm_to_vmem [thread:$0]  %s245, 128, %s247, %s233, 32, 32, 2
        $region20: #{tpu_custom_call.1} parent=15 // pred_fallthru
          _
        // Predicated region
        $region21: #{tpu_custom_call.1} parent=15 // pred_check
          %p253 = pneg %p100
        $region22: #{tpu_custom_call.1} parent=15 // pred_check_branch
          %255 = sbr.rel (%p253) target = $region24
        $region23: #{tpu_custom_call.1} parent=15 // pred_region
          %s256 = sand.u32 %s90, 1
          %s257 = scalar_lea.sflag [#allocation6], %s256
          %s258 = sand.u32 %s90, 1
          %s259 = smul.addr %s258, 2
          %s260 = scalar_lea.vmem [#allocation5], %s259
          %s261 = sadd.s32 %s34, %s35
          %263 = vsyncadd %s257, 0
          %s264 = sadd.s32 %s36, %s261
          %s265 = smul.addr %s264, 2
          %s266 = scalar_lea.hbm %s1, %s265
          %s268 = sshll.u32 %s266, 4
          %s269 = int_to_ptr.hbm [resolvable:$true] %s268
          %s270 = sshll.u32 %s260, 4
          %s271 = int_to_ptr.vmem [resolvable:$true] %s270
          %273 = dma.hbm_to_vmem [thread:$0]  %s269, 32, %s271, %s257
        $region24: #{tpu_custom_call.1} parent=15 // pred_fallthru
          _
      $region16: #{tpu_custom_call.1} parent=5 // pred_fallthru
        _
      %p274 = scmp.le.s32.totalorder 1, %s27
      %p275 = scmp.lt.s32.totalorder %s27, 3
      %p276 = pnand %p274, %p275
      %p277 = pneg %p276
      // Predicated region
      $region25: #{tpu_custom_call.1} parent=5 // pred_check
        _
      $region26: #{tpu_custom_call.1} parent=5 // pred_check_branch
        %279 = sbr.rel (%p276) target = $region28
      $region27: #{tpu_custom_call.1} parent=5 // pred_region
        %s280 = ssub.s32 %s27, 1
        %s281 = sand.u32 %s63, 1
        %s282 = scalar_lea.sflag [#allocation3], %s281
        %s283 = sand.u32 %s63, 1
        %s284 = smul.addr %s283, 8
        %s285 = scalar_lea.vmem [#allocation2], %s284
        // Predicated region
        $region29: #{tpu_custom_call.1} parent=27 // pred_check
          %p286 = pneg %p76
        $region30: #{tpu_custom_call.1} parent=27 // pred_check_branch
          %288 = sbr.rel (%p286) target = $region32
        $region31: #{tpu_custom_call.1} parent=27 // pred_region
          %290 = dma.done %s282, 128
        $region32: #{tpu_custom_call.1} parent=27 // pred_fallthru
          _
        %s291 = sand.u32 %s93, 1
        %s292 = scalar_lea.sflag [#allocation6], %s291
        %s293 = sand.u32 %s93, 1
        %s294 = smul.addr %s293, 2
        %s295 = scalar_lea.vmem [#allocation5], %s294
        // Predicated region
        $region33: #{tpu_custom_call.1} parent=27 // pred_check
          %p296 = pneg %p106
        $region34: #{tpu_custom_call.1} parent=27 // pred_check_branch
          %298 = sbr.rel (%p296) target = $region36
        $region35: #{tpu_custom_call.1} parent=27 // pred_region
          %300 = dma.done %s292, 32
        $region36: #{tpu_custom_call.1} parent=27 // pred_fallthru
          _
        %s301 = sand.u32 %s63, 1
        %s302 = scalar_lea.sflag [#allocation3], %s301
        %s303 = sand.u32 %s63, 1
        %s304 = smul.addr %s303, 8
        %s305 = scalar_lea.vmem [#allocation2], %s304
        %p306 = pneg %p76
        %p307 = pneg %p73
        %s308 = sand.u32 %s93, 1
        %s309 = scalar_lea.sflag [#allocation6], %s308
        %s310 = sand.u32 %s93, 1
        %s311 = smul.addr %s310, 2
        %s312 = scalar_lea.vmem [#allocation5], %s311
        %p313 = pneg %p106
        %p314 = pneg %p103
        %p315 = pneg %p132
        %p316 = pneg %p129
        %s317 = sand.u32 %s119, 1
        %s318 = scalar_lea.sflag [#allocation4], %s317
        %s319 = sand.u32 %s119, 1
        %s320 = smul.addr %s319, 8
        %s321 = scalar_lea.vmem [#allocation7], %s320
        %p322 = pneg %p158
        %p323 = pneg %p155
        %s324 = sand.u32 %s32, 1
        %s325 = scalar_lea.sflag [#allocation9], %s324
        %s326 = sand.u32 %s145, 1
        %s327 = smul.addr %s326, 8
        %s328 = scalar_lea.vmem [#allocation8], %s327
        %p329 = pneg %p184
        %p330 = pneg %p181
        %s331 = sand.u32 %s32, 1
        %s332 = scalar_lea.sflag [#allocation9], %s331
        %s333 = sand.u32 %s171, 1
        %s334 = smul.addr %s333, 8
        %s335 = scalar_lea.vmem [#allocation10], %s334
        %p336 = pneg %p210
        %p337 = pneg %p207
        %s338 = sand.u32 %s197, 1
        %s339 = scalar_lea.sflag [#allocation12], %s338
        %s340 = sand.u32 %s197, 1
        %s341 = smul.addr %s340, 2
        %s342 = scalar_lea.vmem [#allocation11], %s341
        %s343 = sadd.s32 %s37, %s38
        %s344 = sadd.s32 %s37, %s38
        %p345 = scmp.eq.s32.totalorder %s38, 0
        %p346 = scmp.eq.s32.totalorder %s39, 0
        %p347 = pnand %p345, %p346
        %p348 = pneg %p347
        // Predicated region
        $region37: #{tpu_custom_call.1} parent=27 // pred_check
          _
        $region38: #{tpu_custom_call.1} parent=27 // pred_check_branch
          %350 = sbr.rel (%p347) target = $region40
        $region39: #{tpu_custom_call.1} parent=27 // pred_region
          %351 = vst [vmem:[%s321] sm:$0x3] 0.0
          %352 = vst [vmem:[%s321 + $0x2] sm:$0x3] 0.0
          %353 = vst [vmem:[%s321 + $0x4] sm:$0x3] 0.0
          %354 = vst [vmem:[%s321 + $0x6] sm:$0x3] 0.0
          %355 = vst [vmem:[%s328] sm:$0x3] 0.0
          %356 = vst [vmem:[%s328 + $0x2] sm:$0x3] 0.0
          %357 = vst [vmem:[%s328 + $0x4] sm:$0x3] 0.0
          %358 = vst [vmem:[%s328 + $0x6] sm:$0x3] 0.0
          %359 = vst [vmem:[%s335] sm:$0x3] 0.0
          %360 = vst [vmem:[%s335 + $0x2] sm:$0x3] 0.0
          %361 = vst [vmem:[%s335 + $0x4] sm:$0x3] 0.0
          %362 = vst [vmem:[%s335 + $0x6] sm:$0x3] 0.0
          %363 = vst [vmem:[%s342] sm:$0x3] 0.0
        $region40: #{tpu_custom_call.1} parent=27 // pred_fallthru
          _
        %v364 = vld [vmem:[%s285] sm:$0x3]
        %v365 = vld [vmem:[%s285 + $0x2] sm:$0x3]
        %v366 = vld [vmem:[%s285 + $0x4] sm:$0x3]
        %v367 = vld [vmem:[%s285 + $0x6] sm:$0x3]
        %v368 = vld [vmem:[%s295] sm:$0x3]
        %vm369 = vcmask 1041408
        %v370 = vsel %vm369, %v364, -inf
        %v371 = vsel %vm369, %v365, -inf
        %v372 = vsel %vm369, %v366, -inf
        %v373 = vsel %vm369, %v367, -inf
        %v374 = vmax.f32 %v370, %v371
        %v375 = vmax.f32 %v372, %v373
        %v376 = vmax.f32 %v374, %v375
        %v377 = vsub.f32 %v364, %v376
        %v378 = vsub.f32 %v365, %v376
        %v379 = vsub.f32 %v366, %v376
        %v380 = vsub.f32 %v367, %v376
        %v381 = vmul.f32 %v377, 1.442695
        %v382 = vpow.pop %v381
        %v383 = vmul.f32 %v378, 1.442695
        %v384 = vpow.pop %v383
        %v385 = vmul.f32 %v379, 1.442695
        %v386 = vpow.pop %v385
        %v387 = vmul.f32 %v380, 1.442695
        %v388 = vpow.pop %v387
        %v389 = vsel %vm369, %v382, 0.0
        %v390 = vsel %vm369, %v384, 0.0
        %v391 = vadd.f32 %v389, %v390
        %v392 = vsel %vm369, %v386, 0.0
        %v393 = vadd.f32 %v391, %v392
        %v394 = vsel %vm369, %v388, 0.0
        %v395 = vadd.f32 %v393, %v394
        %v396 = vrcp.pop %v395
        %v397 = vmul.f32 %v395, %v396
        %v398 = vsub.f32 1.0, %v397
        %v399 = vmul.f32 %v396, %v398
        %v400 = vadd.f32 %v396, %v399
        %vm401 = vweird.f32 %v395
        %vm402 = vweird.f32 %v396
        %vm403 = vmor %vm401, %vm402
        %v404 = vsel %vm403, %v396, %v400
        %v405 = vand.u32 2147483647, %v395
        %vm406 = vcmp.eq.f32.partialorder %v405, 8.507059e+37
        %v407 = vand.u32 %v395, 2147483648
        %v408 = vor.u32 1.1754944e-38, %v407
        %v409 = vsel %vm406, %v408, %v404
        %v410 = vmul.f32 1.0, %v409
        %v411 = vmul.f32 %v382, %v410
        %v412 = vmul.f32 %v384, %v410
        %v413 = vmul.f32 %v386, %v410
        %v414 = vmul.f32 %v388, %v410
        %vm415 = vcmp.eq.s32.totalorder %v368, 0
        %vm416 = vcmp.eq.s32.totalorder %v368, 1
        %vm417 = vcmp.eq.s32.totalorder %v368, 2
        %vm418 = vcmp.eq.s32.totalorder %v368, 3
        %v419 = vsel %vm415, %v411, 0.0
        %v420 = vsel %vm416, %v412, 0.0
        %v421 = vsel %vm417, %v413, 0.0
        %v422 = vsel %vm418, %v414, 0.0
        %v423 = vsel %vm415, %v364, 0.0
        %v424 = vsel %vm416, %v365, 0.0
        %v425 = vsel %vm417, %v366, 0.0
        %v426 = vsel %vm418, %v367, 0.0
        %v427 = vsel %vm415, 1, 0
        %v428 = vsel %vm416, 1, 0
        %v429 = vsel %vm417, 1, 0
        %v430 = vsel %vm418, 1, 0
        %v431 = vcvt.s32.f32 %v427
        %v432 = vcvt.s32.f32 %v428
        %v433 = vcvt.s32.f32 %v429
        %v434 = vcvt.s32.f32 %v430
        %v435 = vlog2.pop %v395
        %v436 = vmul.f32 %v435, 0.6931472
        %v437 = vadd.f32 %v376, %v436
        %v438 = vsel %vm369, %v423, 0.0
        %v439 = vsel %vm369, %v424, 0.0
        %v440 = vadd.f32 %v438, %v439
        %v441 = vsel %vm369, %v425, 0.0
        %v442 = vadd.f32 %v440, %v441
        %v443 = vsel %vm369, %v426, 0.0
        %v444 = vadd.f32 %v442, %v443
        %v445 = vsub.f32 %v437, %v444
        %v446 = vld [vmem:[%s321] sm:$0x3]
        %v447 = vld [vmem:[%s321 + $0x2] sm:$0x3]
        %v448 = vld [vmem:[%s321 + $0x4] sm:$0x3]
        %v449 = vld [vmem:[%s321 + $0x6] sm:$0x3]
        %v450 = vadd.f32 %v446, %v419
        %v451 = vadd.f32 %v447, %v420
        %v452 = vadd.f32 %v448, %v421
        %v453 = vadd.f32 %v449, %v422
        %454 = vst [vmem:[%s321] sm:$0x3] %v450
        %455 = vst [vmem:[%s321 + $0x2] sm:$0x3] %v451
        %456 = vst [vmem:[%s321 + $0x4] sm:$0x3] %v452
        %457 = vst [vmem:[%s321 + $0x6] sm:$0x3] %v453
        %v458 = vld [vmem:[%s328] sm:$0x3]
        %v459 = vld [vmem:[%s328 + $0x2] sm:$0x3]
        %v460 = vld [vmem:[%s328 + $0x4] sm:$0x3]
        %v461 = vld [vmem:[%s328 + $0x6] sm:$0x3]
        %v462 = vadd.f32 %v458, %v411
        %v463 = vadd.f32 %v459, %v412
        %v464 = vadd.f32 %v460, %v413
        %v465 = vadd.f32 %v461, %v414
        %466 = vst [vmem:[%s328] sm:$0x3] %v462
        %467 = vst [vmem:[%s328 + $0x2] sm:$0x3] %v463
        %468 = vst [vmem:[%s328 + $0x4] sm:$0x3] %v464
        %469 = vst [vmem:[%s328 + $0x6] sm:$0x3] %v465
        %v470 = vld [vmem:[%s335] sm:$0x3]
        %v471 = vld [vmem:[%s335 + $0x2] sm:$0x3]
        %v472 = vld [vmem:[%s335 + $0x4] sm:$0x3]
        %v473 = vld [vmem:[%s335 + $0x6] sm:$0x3]
        %v474 = vadd.f32 %v470, %v431
        %v475 = vadd.f32 %v471, %v432
        %v476 = vadd.f32 %v472, %v433
        %v477 = vadd.f32 %v473, %v434
        %478 = vst [vmem:[%s335] sm:$0x3] %v474
        %479 = vst [vmem:[%s335 + $0x2] sm:$0x3] %v475
        %480 = vst [vmem:[%s335 + $0x4] sm:$0x3] %v476
        %481 = vst [vmem:[%s335 + $0x6] sm:$0x3] %v477
        %v482 = vld [vmem:[%s342] sm:$0x3]
        %v483 = vadd.f32 %v482, %v445
        %484 = vst [vmem:[%s342] sm:$0x3] %v483
        %s485 = sand.u32 %s119, 1
        %s486 = scalar_lea.sflag [#allocation4], %s485
        %s487 = sand.u32 %s119, 1
        %s488 = smul.addr %s487, 8
        %s489 = scalar_lea.vmem [#allocation7], %s488
        %s490 = sand.u32 %s32, 1
        %s491 = scalar_lea.sflag [#allocation9], %s490
        %s492 = sand.u32 %s145, 1
        %s493 = smul.addr %s492, 8
        %s494 = scalar_lea.vmem [#allocation8], %s493
        %s495 = sand.u32 %s32, 1
        %s496 = scalar_lea.sflag [#allocation9], %s495
        %s497 = sand.u32 %s171, 1
        %s498 = smul.addr %s497, 8
        %s499 = scalar_lea.vmem [#allocation10], %s498
        %s500 = sand.u32 %s197, 1
        %s501 = scalar_lea.sflag [#allocation12], %s500
        %s502 = sand.u32 %s197, 1
        %s503 = smul.addr %s502, 2
        %s504 = scalar_lea.vmem [#allocation11], %s503
        // Predicated region
        $region41: #{tpu_custom_call.1} parent=27 // pred_check
          %p505 = pneg %p129
        $region42: #{tpu_custom_call.1} parent=27 // pred_check_branch
          %507 = sbr.rel (%p505) target = $region44
        $region43: #{tpu_custom_call.1} parent=27 // pred_region
          %509 = vsyncadd %s486, 0
          %s510 = smul.addr %s37, 4
          %s511 = smul.addr %s510, 2
          %s512 = scalar_lea.hbm %s2, %s511
          %s513 = sshll.u32 %s489, 4
          %s514 = int_to_ptr.vmem [resolvable:$true] %s513
          %s515 = sshll.u32 %s512, 4
          %s516 = int_to_ptr.hbm [resolvable:$true] %s515
          %521 = dma.vmem_to_hbm [thread:$0]  %s514, 128, %s516, %s486, 32, 32, 2
        $region44: #{tpu_custom_call.1} parent=27 // pred_fallthru
          _
        // Predicated region
        $region45: #{tpu_custom_call.1} parent=27 // pred_check
          %p522 = pneg %p155
        $region46: #{tpu_custom_call.1} parent=27 // pred_check_branch
          %524 = sbr.rel (%p522) target = $region48
        $region47: #{tpu_custom_call.1} parent=27 // pred_region
          %526 = vsyncadd %s491, 0
          %s527 = smul.addr %s37, 4
          %s528 = smul.addr %s527, 2
          %s529 = scalar_lea.hbm %s3, %s528
          %s530 = sshll.u32 %s494, 4
          %s531 = int_to_ptr.vmem [resolvable:$true] %s530
          %s532 = sshll.u32 %s529, 4
          %s533 = int_to_ptr.hbm [resolvable:$true] %s532
          %538 = dma.vmem_to_hbm [thread:$0]  %s531, 128, %s533, %s491, 32, 32, 2
        $region48: #{tpu_custom_call.1} parent=27 // pred_fallthru
          _
        // Predicated region
        $region49: #{tpu_custom_call.1} parent=27 // pred_check
          %p539 = pneg %p181
        $region50: #{tpu_custom_call.1} parent=27 // pred_check_branch
          %541 = sbr.rel (%p539) target = $region52
        $region51: #{tpu_custom_call.1} parent=27 // pred_region
          %543 = vsyncadd %s496, 0
          %s544 = smul.addr %s37, 4
          %s545 = smul.addr %s544, 2
          %s546 = scalar_lea.hbm %s4, %s545
          %s547 = sshll.u32 %s499, 4
          %s548 = int_to_ptr.vmem [resolvable:$true] %s547
          %s549 = sshll.u32 %s546, 4
          %s550 = int_to_ptr.hbm [resolvable:$true] %s549
          %555 = dma.vmem_to_hbm [thread:$0]  %s548, 128, %s550, %s496, 32, 32, 2
        $region52: #{tpu_custom_call.1} parent=27 // pred_fallthru
          _
        // Predicated region
        $region53: #{tpu_custom_call.1} parent=27 // pred_check
          %p556 = pneg %p207
        $region54: #{tpu_custom_call.1} parent=27 // pred_check_branch
          %558 = sbr.rel (%p556) target = $region56
        $region55: #{tpu_custom_call.1} parent=27 // pred_region
          %560 = vsyncadd %s501, 0
          %s561 = smul.addr %s37, 2
          %s562 = scalar_lea.hbm %s5, %s561
          %s564 = sshll.u32 %s504, 4
          %s565 = int_to_ptr.vmem [resolvable:$true] %s564
          %s566 = sshll.u32 %s562, 4
          %s567 = int_to_ptr.hbm [resolvable:$true] %s566
          %569 = dma.vmem_to_hbm [thread:$0]  %s565, 32, %s567, %s501
        $region56: #{tpu_custom_call.1} parent=27 // pred_fallthru
          _
      $region28: #{tpu_custom_call.1} parent=5 // pred_fallthru
        _
      %p570 = scmp.le.s32.totalorder 2, %s27
      // Predicated region
      $region57: #{tpu_custom_call.1} parent=5 // pred_check
        %p571 = pneg %p570
      $region58: #{tpu_custom_call.1} parent=5 // pred_check_branch
        %573 = sbr.rel (%p571) target = $region60
      $region59: #{tpu_custom_call.1} parent=5 // pred_region
        %s574 = ssub.s32 %s27, 2
        // Predicated region
        $region61: #{tpu_custom_call.1} parent=59 // pred_check
          %p575 = pneg %p135
        $region62: #{tpu_custom_call.1} parent=59 // pred_check_branch
          %577 = sbr.rel (%p575) target = $region64
        $region63: #{tpu_custom_call.1} parent=59 // pred_region
          %s578 = sand.u32 %s120, 1
          %s579 = scalar_lea.sflag [#allocation4], %s578
          %s580 = sand.u32 %s120, 1
          %s581 = smul.addr %s580, 8
          %s582 = scalar_lea.vmem [#allocation7], %s581
          %584 = dma.done %s579, 128
        $region64: #{tpu_custom_call.1} parent=59 // pred_fallthru
          _
        // Predicated region
        $region65: #{tpu_custom_call.1} parent=59 // pred_check
          %p585 = pneg %p161
        $region66: #{tpu_custom_call.1} parent=59 // pred_check_branch
          %587 = sbr.rel (%p585) target = $region68
        $region67: #{tpu_custom_call.1} parent=59 // pred_region
          %s588 = sand.u32 %s33, 1
          %s589 = scalar_lea.sflag [#allocation9], %s588
          %s590 = sand.u32 %s146, 1
          %s591 = smul.addr %s590, 8
          %s592 = scalar_lea.vmem [#allocation8], %s591
          %594 = dma.done %s589, 128
        $region68: #{tpu_custom_call.1} parent=59 // pred_fallthru
          _
        // Predicated region
        $region69: #{tpu_custom_call.1} parent=59 // pred_check
          %p595 = pneg %p187
        $region70: #{tpu_custom_call.1} parent=59 // pred_check_branch
          %597 = sbr.rel (%p595) target = $region72
        $region71: #{tpu_custom_call.1} parent=59 // pred_region
          %s598 = sand.u32 %s33, 1
          %s599 = scalar_lea.sflag [#allocation9], %s598
          %s600 = sand.u32 %s172, 1
          %s601 = smul.addr %s600, 8
          %s602 = scalar_lea.vmem [#allocation10], %s601
          %604 = dma.done %s599, 128
        $region72: #{tpu_custom_call.1} parent=59 // pred_fallthru
          _
        // Predicated region
        $region73: #{tpu_custom_call.1} parent=59 // pred_check
          %p605 = pneg %p213
        $region74: #{tpu_custom_call.1} parent=59 // pred_check_branch
          %607 = sbr.rel (%p605) target = $region76
        $region75: #{tpu_custom_call.1} parent=59 // pred_region
          %s608 = sand.u32 %s198, 1
          %s609 = scalar_lea.sflag [#allocation12], %s608
          %s610 = sand.u32 %s198, 1
          %s611 = smul.addr %s610, 2
          %s612 = scalar_lea.vmem [#allocation11], %s611
          %614 = dma.done %s609, 32
        $region76: #{tpu_custom_call.1} parent=59 // pred_fallthru
          _
      $region60: #{tpu_custom_call.1} parent=5 // pred_fallthru
        _
    $region6: #{tpu_custom_call.1} parent=1 // loop_footer
      %s31 = sadd.s32 1, %s27
    $region7: #{tpu_custom_call.1} parent=1 // loop_footer_branch
      %26 = sbr.rel target = $region3
    $region8: #{tpu_custom_call.1} parent=1 // loop_exit
      _
    %615 = vsyncpa [#allocation3], 1
    %s616 = scalar_lea.sflag [#allocation3], 1
    %617 = vsyncpa %s616, 1
    %618 = vsyncpa [#allocation6], 1
    %s619 = scalar_lea.sflag [#allocation6], 1
    %620 = vsyncpa %s619, 1
    %621 = vsyncpa [#allocation4], 1
    %s622 = scalar_lea.sflag [#allocation4], 1
    %623 = vsyncpa %s622, 1
    %624 = vsyncpa [#allocation9], 1
    %s625 = scalar_lea.sflag [#allocation9], 1
    %626 = vsyncpa %s625, 1
    %627 = vsyncpa [#allocation12], 1
    %s628 = scalar_lea.sflag [#allocation12], 1
    %629 = vsyncpa %s628, 1

</llo_original>
